<compile_context>
chip_gen: v7x
topology: tpu7x:2x2x1
jax: 0.10.0
libtpu: 0.0.40
codegen_flags: <defaults>
</compile_context>

<pallas_src>
import math

import jax
import jax.numpy as jnp
from jax import lax
from jax.experimental import pallas as pl
from jax.experimental.pallas import tpu as pltpu


def _cdiv(a, b):
    return -(-a // b)


def _round_up(a, b):
    return _cdiv(a, b) * b


def _round_down(a, b):
    return (a // b) * b


def _largest_pow2_divisor(n: int, cap_pow2: int) -> int:
    g = 1
    while g * 2 <= cap_pow2 and n % (g * 2) == 0:
        g *= 2
    return g


def _epilogue(partials, batch, num_clusters, g):
    # partials: (..., g * C) f32 per-lane partial sums -> KL(mean(p) || uniform).
    per_lane = partials.reshape(-1, g * num_clusters).sum(axis=0)        # (g*C,)
    per_cluster = per_lane.reshape(g, num_clusters).sum(axis=0)          # (C,)
    p = per_cluster / jnp.float32(batch)
    return jnp.sum(p * jnp.log(p * jnp.float32(num_clusters)))


def kl_cluster_divergence(probs: jax.Array,
                          *,
                          tile_bytes: int = 4 << 20,
                          max_tile_rows: int | None = None,
                          num_cores: int = 2) -> jax.Array:
    """KL(mean(probs, axis=0) || uniform).  probs: (batch, num_clusters), any float dtype."""
    B, C = probs.shape
    itemsize = probs.dtype.itemsize

    # --- Lane packing: (B, C) -> (B2, g*C); free reshape, no padding copies. ---
    R = max(8, 32 // itemsize)                 # sublane group: 8 f32 / 16 bf16 / 32 int8
    g_max = 128 // math.gcd(C, 128)            # power of two; g_max * C = lcm(C, 128)
    g = _largest_pow2_divisor(B, g_max)
    while g > 1 and g * C * itemsize * R > tile_bytes:   # keep >=1 row group per tile
        g //= 2
    B2, C2 = B // g, g * C
    x = probs.reshape(B2, C2)

    # --- Independent accumulators: break the serial VPU add chain. -------------
    vregs_per_acc = _cdiv(R, 8) * _cdiv(C2, 128)
    nacc = max(1, min(8, _cdiv(8, vregs_per_acc)))
    group = R * nacc

    # --- Tiny-batch fast path: one block, no grid machinery. -------------------
    if B2 <= group:
        def small_kernel(x_ref, o_ref):
            o_ref[...] = jnp.sum(x_ref[...].astype(jnp.float32), axis=0, keepdims=True)

        partials = pl.pallas_call(
            small_kernel,
            out_shape=jax.ShapeDtypeStruct((1, C2), jnp.float32),
        )(x)
        return _epilogue(partials, B, C, g)

    # --- Tile sizing: dtype-/lane-aware budget, balanced across cores. ---------
    nc = max(1, int(num_cores))
    budget_rows = max(group, _round_down(tile_bytes // max(1, C2 * itemsize), group))
    balance_rows = _round_up(_cdiv(B2, nc), group)
    tb = min(budget_rows, balance_rows)
    if max_tile_rows is not None:
        tb = min(tb, max(group, _round_down(max_tile_rows, group)))
    num_tiles = _cdiv(B2, tb)                  # row-blocks actually present in x
    tiles_per_core = _cdiv(num_tiles, nc)
    needs_mask = (nc * tiles_per_core * tb) != B2
    n_steps = tb // group
    last_block = num_tiles - 1

    def kernel(x_ref, o_ref):
        c = pl.program_id(0)                   # core split (parallel)
        i = pl.program_id(1)                   # batch tiles (arbitrary, resident acc)

        @pl.when(i == 0)
        def _init():
            o_ref[...] = jnp.zeros_like(o_ref)

        if needs_mask:
            # Valid rows remaining for this (possibly ragged / fully-OOB) tile.
            rows_left = B2 - (c * tiles_per_core + i) * tb
            row_iota = lax.broadcasted_iota(jnp.int32, (R, 1), 0)

        def load_group(start):
            blk = x_ref[pl.ds(start, R), :].astype(jnp.float32)
            if needs_mask:
                blk = jnp.where((start + row_iota) < rows_left, blk, 0.0)
            return blk

        def step(s, accs):
            if isinstance(s, int):
                base = s * group
            else:
                base = pl.multiple_of(s * group, group)
            return tuple(accs[a] + load_group(base + a * R) for a in range(nacc))

        init = (jnp.zeros((R, C2), jnp.float32),) * nacc
        if n_steps == 1:
            accs = step(0, init)
        else:
            accs = lax.fori_loop(0, n_steps, step, init, unroll=min(4, n_steps))
        part = accs[0]
        for a in range(1, nacc):
            part = part + accs[a]
        o_ref[...] += part.reshape(o_ref.shape)

    compiler_kwargs = dict(dimension_semantics=("parallel", "arbitrary"))
    vmem_est = 2 * tb * C2 * itemsize + 2 * R * C2 * 4 + (2 << 20)
    if vmem_est > (14 << 20):       # only when the caller raised tile_bytes (v5e default = 16 MiB)
        compiler_kwargs["vmem_limit_bytes"] = int(min(vmem_est, 64 << 20))
    # TODO(synk): tile the cluster axis too for extremely large num_clusters.

    partials = pl.pallas_call(
        kernel,
        out_shape=jax.ShapeDtypeStruct((nc, R, C2), jnp.float32),
        grid=(nc, tiles_per_core),
        in_specs=[pl.BlockSpec(
            (tb, C2),
            lambda c, i: (jnp.minimum(c * tiles_per_core + i, last_block), 0))],
        out_specs=pl.BlockSpec((1, R, C2), lambda c, i: (c, 0, 0)),
        compiler_params=pltpu.CompilerParams(**compiler_kwargs),
    )(x)
    return _epilogue(partials, B, C, g)


def kl_cluster_divergence_ref(probs: jax.Array) -> jax.Array:
    """Plain-JAX reference mirroring the PyTorch forward."""
    num_clusters = probs.shape[1]
    target = jnp.full((num_clusters,), 1.0 / num_clusters, dtype=jnp.float32)
    p = jnp.mean(probs.astype(jnp.float32), axis=0)
    return jnp.sum(p * jnp.log(p / target))


if __name__ == "__main__":
    key = jax.random.PRNGKey(0)

    # (batch, num_clusters, dtype, max_tile_rows)
    cases = [
        (8,    16,  jnp.float32,  None),  # tiny: lane-packed to 128 lanes, single-block fast path
        (4096, 16,  jnp.bfloat16, 64),    # bf16, packed, multi-tile, 2-way core split, exact tiling
        (517,  200, jnp.float32,  64),    # odd B, C not dividing 128: ragged -> in-kernel masking
        (1000, 10,  jnp.bfloat16, None),  # partial packing (g=8), ragged last tile per core
    ]
    for idx, (batch, ncl, dtype, tile_rows) in enumerate(cases):
        k = jax.random.fold_in(key, idx)
        logits = jax.random.normal(k, (batch, ncl), dtype=jnp.float32)
        probs = jax.nn.softmax(logits, axis=-1).astype(dtype)

        out = jax.block_until_ready(
            kl_cluster_divergence(probs, max_tile_rows=tile_rows, num_cores=2))
        ref = kl_cluster_divergence_ref(probs)
        assert jnp.allclose(out, ref, atol=5e-5, rtol=1e-3), \
            (batch, ncl, str(dtype), float(out), float(ref))

    print("KERNEL_OK")
</pallas_src>

<mosaic_0001>
module attributes {stable_mosaic.version = 11 : i64} {
  func.func @small_kernel(%arg0: memref<1x128xf32, #tpu.memory_space<vmem>>, %arg1: memref<1x128xf32, #tpu.memory_space<vmem>>) attributes {dimension_semantics = [], scalar_prefetch = 0 : i64, scratch_operands = 0 : i64, tpu.core_type = #tpu.core_type<tc>} {
    %c0 = arith.constant 0 : index
    %c0_0 = arith.constant 0 : index
    %0 = vector.load %arg0[%c0, %c0_0] : memref<1x128xf32, #tpu.memory_space<vmem>>, vector<1x128xf32>
    %cst = arith.constant dense<0.000000e+00> : vector<128xf32>
    %1 = vector.multi_reduction <add>, %0, %cst [0] : vector<1x128xf32> to vector<128xf32>
    %2 = vector.shape_cast %1 : vector<128xf32> to vector<1x128xf32>
    %c0_1 = arith.constant 0 : index
    %c0_2 = arith.constant 0 : index
    %3 = vector.load %arg1[%c0_1, %c0_2] : memref<1x128xf32, #tpu.memory_space<vmem>>, vector<1x128xf32>
    tpu.vector_store %arg1[%c0_1, %c0_2], %2 {strides = array<i32>} : memref<1x128xf32, #tpu.memory_space<vmem>>, vector<1x128xf32>,
    return
  }
}

</mosaic_0001>

<llo_original>
// kernel: tpu_custom_call.1
$region0: #{tpu_custom_call.1}
  #allocation0 [shape = 'u32[]', space=smem, size = 0x4, offset = 0x4, fixed_abs, tag = 'smem constant byte address 0x4 - core index']
  #allocation1 [shape = 'u32[144,128]{1,0:T(1,128)}', space=vmem, size = 0x12000, scoped, tag = 'internal scratch']
  %s0 = inlined_call_operand.hbm [shape: f32[1,128], index: 0, kind: input, shape index: {}]
  %s1 = inlined_call_operand.hbm [shape: f32[1,128], index: 1, kind: output, shape index: {}]
  %s2 = sld [smem:[#allocation0]]
  $region18: #{tpu_custom_call.1} parent=0
    _
  %s4 = ssub.s32 1, %s2
  %s5 = scalar_select 0, %s4, %s2
  $region1: #{tpu_custom_call.1} parent=0
    #allocation2 [shape = 'u8[512]{0}', space=vmem, size = 0x400, scoped, tag = 'input window, operand 0, single buffered']
    #allocation3 [shape = 's32[1]{0}', space=sflag, size = 0x4, scoped, tag = 'scoped memory for tpu_custom_call.1']
    #allocation4 [shape = 's32[1]{0}', space=sflag, size = 0x4, scoped, tag = 'scoped memory for tpu_custom_call.1']
    #allocation5 [shape = 'u8[512]{0}', space=vmem, size = 0x400, scoped, tag = 'output window, operand 0, single buffered']
    %6 = vsyncpa [#allocation3], 0
    %7 = vsyncpa [#allocation4], 0
    // Predicated region
    $region2: #{tpu_custom_call.1} parent=1 // pred_check
      _
    $region3: #{tpu_custom_call.1} parent=1 // pred_check_branch
      %9 = sbr.rel (0) target = $region5
    $region4: #{tpu_custom_call.1} parent=1 // pred_region
      %s11 = ssub.s32 16, 16
      %12 = vsyncadd [#allocation3], %s11
      %s14 = sshll.u32 [#allocation2], 4
      %s15 = int_to_ptr.vmem [resolvable:$true] %s14
      %17 = dma.hbm_to_vmem [thread:$0]  %s0, 16, %s15, [#allocation3]
    $region5: #{tpu_custom_call.1} parent=1 // pred_fallthru
      _
    // Predicated region
    $region6: #{tpu_custom_call.1} parent=1 // pred_check
      _
    $region7: #{tpu_custom_call.1} parent=1 // pred_check_branch
      %19 = sbr.rel (0) target = $region9
    $region8: #{tpu_custom_call.1} parent=1 // pred_region
      %20 = dma.done [#allocation3], 16
    $region9: #{tpu_custom_call.1} parent=1 // pred_fallthru
      _
    %v21 = vld [vmem:[#allocation2] sm:$0x1]
    %v22 = vadd.f32 %v21, 0.0
    %23 = vst [vmem:[#allocation5] sm:$0x1] %v22
    // Predicated region
    $region10: #{tpu_custom_call.1} parent=1 // pred_check
      _
    $region11: #{tpu_custom_call.1} parent=1 // pred_check_branch
      %25 = sbr.rel (0) target = $region13
    $region12: #{tpu_custom_call.1} parent=1 // pred_region
      %s27 = ssub.s32 16, 16
      %28 = vsyncadd [#allocation4], %s27
      %s30 = sshll.u32 [#allocation5], 4
      %s31 = int_to_ptr.vmem [resolvable:$true] %s30
      %33 = dma.vmem_to_hbm [thread:$0]  %s31, 16, %s1, [#allocation4]
    $region13: #{tpu_custom_call.1} parent=1 // pred_fallthru
      _
    // Predicated region
    $region14: #{tpu_custom_call.1} parent=1 // pred_check
      _
    $region15: #{tpu_custom_call.1} parent=1 // pred_check_branch
      %35 = sbr.rel (0) target = $region17
    $region16: #{tpu_custom_call.1} parent=1 // pred_region
      %36 = dma.done [#allocation4], 16
    $region17: #{tpu_custom_call.1} parent=1 // pred_fallthru
      _
    %37 = vsyncpa [#allocation3], 1
    %38 = vsyncpa [#allocation4], 1

</llo_original>
